<compile_context>
chip_gen: v7x
topology: tpu7x:2x2x1
jax: 0.10.0
libtpu: 0.0.40
codegen_flags: <defaults>
</compile_context>

<pallas_src>
import jax
import jax.numpy as jnp
from jax import lax
from jax.experimental import pallas as pl
from jax.experimental.pallas import tpu as pltpu


def _basic_block_kernel(x_ref, w1_ref, b1_ref, w2_ref, b2_ref, o_ref, mid_ref):
    # x_ref  : (1, H, W*C)    lane-dense input slab for one batch element
    # w*_ref : (3, W*C, W*P)  banded conv weights (BN scale folded in)
    # b*_ref : (1, W*P)       per-channel BN bias, tiled across W
    # o_ref  : (1, H, W*P)
    # mid_ref: VMEM scratch (H+2, W*P); rows 0 and H+1 are the zero border used
    #          for height padding, rows 1..H hold x, then y1.
    H = o_ref.shape[1]
    WP = o_ref.shape[2]

    # Zero only the two border rows (interior writes never touch them).
    zero_row = jnp.zeros((1, WP), jnp.float32)
    mid_ref[0:1, :] = zero_row
    mid_ref[H + 1:H + 2, :] = zero_row

    x_val = x_ref[0]                       # (H, W*C) — also the residual
    mid_ref[1:H + 1, :] = x_val            # full-lane-width store

    # ---- conv1 (+ folded bn1 scale): 3 banded MXU matmuls over dh taps ----
    acc1 = jnp.zeros((H, WP), jnp.float32)
    for dh in range(3):
        acc1 = acc1 + jnp.dot(mid_ref[dh:dh + H, :], w1_ref[dh],
                              preferred_element_type=jnp.float32)
    y1 = jnp.maximum(acc1 + b1_ref[...], 0.0)          # bn1 bias + relu

    # ---- stage y1 (lane-dense) and run conv2 ----
    mid_ref[1:H + 1, :] = y1
    acc2 = jnp.zeros((H, WP), jnp.float32)
    for dh in range(3):
        acc2 = acc2 + jnp.dot(mid_ref[dh:dh + H, :], w2_ref[dh],
                              preferred_element_type=jnp.float32)

    # ---- bn2 bias + residual add + relu ----
    o_ref[0] = jnp.maximum(acc2 + b2_ref[...] + x_val, 0.0)


def _banded_weights(w_oihw, scale, W):
    """Fold BN scale + horizontal taps + width zero-padding into one banded
    weight matrix per vertical tap.

    Returns (3, W*Cin, W*P) with
      out[dh][win*Cin + c, w*P + p] = sum_{dw : win == w + dw - 1} scale[p] * w[p,c,dh,dw]
    so a lane-dense (w, c) input row maps straight to a lane-dense (w, p) row.
    """
    P, Cin, _, _ = w_oihw.shape
    w_hwio = jnp.transpose(w_oihw, (2, 3, 1, 0)).astype(jnp.float32)  # (3,3,Cin,P)
    w_scaled = w_hwio * scale[None, None, None, :]
    mats = []
    for dh in range(3):
        m = jnp.zeros((W * Cin, W * P), jnp.float32)
        for dw in range(3):
            # sel[win, w] = 1 iff win == w + dw - 1 (out-of-range == zero pad)
            sel = jnp.eye(W, W, k=1 - dw, dtype=jnp.float32)
            m = m + jnp.kron(sel, w_scaled[dh, dw])
        mats.append(m)
    return jnp.stack(mats, axis=0)


def basic_block_pallas(x_nchw, w1, g1, be1, rm1, rv1, w2, g2, be2, rm2, rv2,
                       eps=1e-5):
    """x_nchw: (N, C, H, W) float32.  Conv weights in PyTorch OIHW layout."""
    N, C, H, W = x_nchw.shape
    P = w1.shape[0]
    assert C == P, "BasicBlock with downsample=None requires inplanes == planes"

    # NCHW -> lane-dense (N, H, W*C) slab; no wrapper-side zero padding.
    x_flat = jnp.transpose(x_nchw, (0, 2, 3, 1)).astype(jnp.float32)
    x_flat = x_flat.reshape(N, H, W * C)

    # Fold eval-mode BN: scale into the weights, keep only the bias in-kernel.
    s1 = (g1 / jnp.sqrt(rv1 + eps)).astype(jnp.float32)
    b1 = (be1 - rm1 * s1).astype(jnp.float32)
    s2 = (g2 / jnp.sqrt(rv2 + eps)).astype(jnp.float32)
    b2 = (be2 - rm2 * s2).astype(jnp.float32)

    wb1 = _banded_weights(w1, s1, W)            # (3, W*C, W*P)
    wb2 = _banded_weights(w2, s2, W)            # (3, W*P, W*P)
    b1t = jnp.tile(b1, W).reshape(1, W * P)     # lane w*P + p holds b[p]
    b2t = jnp.tile(b2, W).reshape(1, W * P)

    flops = 2 * 2 * N * H * W * 9 * C * P       # two 3x3 convs (mul + add)
    bytes_accessed = 4 * (x_flat.size + N * H * W * P + wb1.size + wb2.size
                          + b1t.size + b2t.size)

    out_flat = pl.pallas_call(
        _basic_block_kernel,
        out_shape=jax.ShapeDtypeStruct((N, H, W * P), jnp.float32),
        grid_spec=pltpu.PrefetchScalarGridSpec(
            num_scalar_prefetch=0,
            grid=(N,),
            in_specs=[
                pl.BlockSpec((1, H, W * C), lambda n: (n, 0, 0)),
                pl.BlockSpec((3, W * C, W * P), lambda n: (0, 0, 0)),
                pl.BlockSpec((1, W * P), lambda n: (0, 0)),
                pl.BlockSpec((3, W * P, W * P), lambda n: (0, 0, 0)),
                pl.BlockSpec((1, W * P), lambda n: (0, 0)),
            ],
            out_specs=pl.BlockSpec((1, H, W * P), lambda n: (n, 0, 0)),
            scratch_shapes=[pltpu.VMEM((H + 2, W * P), jnp.float32)],
        ),
        compiler_params=pltpu.CompilerParams(
            dimension_semantics=("parallel",)),
        cost_estimate=pl.CostEstimate(flops=flops, transcendentals=0,
                                      bytes_accessed=bytes_accessed),
    )(x_flat, wb1, b1t, wb2, b2t)

    # (N, H, W*P) -> NCHW to match the PyTorch output convention.
    out_nhwc = out_flat.reshape(N, H, W, P)
    return jnp.transpose(out_nhwc, (0, 3, 1, 2))


def _reference(x_nchw, w1, g1, be1, rm1, rv1, w2, g2, be2, rm2, rv2, eps=1e-5):
    """Pure-JAX reference (lax conv) for correctness check."""
    x = jnp.transpose(x_nchw, (0, 2, 3, 1))
    dn = ("NHWC", "HWIO", "NHWC")

    def conv(v, w_oihw):
        return lax.conv_general_dilated(
            v, jnp.transpose(w_oihw, (2, 3, 1, 0)),
            window_strides=(1, 1), padding="SAME", dimension_numbers=dn)

    def bn(v, g, b, m, var):
        return (v - m) / jnp.sqrt(var + eps) * g + b

    y = jax.nn.relu(bn(conv(x, w1), g1, be1, rm1, rv1))
    y = bn(conv(y, w2), g2, be2, rm2, rv2)
    y = jax.nn.relu(y + x)
    return jnp.transpose(y, (0, 3, 1, 2))


if __name__ == "__main__":
    key = jax.random.PRNGKey(0)
    ks = jax.random.split(key, 8)

    N, C, H, W = 2, 8, 16, 16   # inplanes = planes = 8, stride = 1; W*C = 128
    P = C

    x = jax.random.normal(ks[0], (N, C, H, W), jnp.float32)

    # conv weights (OIHW), Kaiming-ish scale, deterministic.
    fan1 = C * 9
    w1 = jax.random.normal(ks[1], (P, C, 3, 3), jnp.float32) * (2.0 / fan1) ** 0.5
    fan2 = P * 9
    w2 = jax.random.normal(ks[2], (P, P, 3, 3), jnp.float32) * (2.0 / fan2) ** 0.5

    # BN params / running stats (eval mode), deterministic.
    g1 = 1.0 + 0.1 * jax.random.normal(ks[3], (P,), jnp.float32)
    be1 = 0.1 * jax.random.normal(ks[4], (P,), jnp.float32)
    rm1 = 0.05 * jax.random.normal(ks[5], (P,), jnp.float32)
    rv1 = 1.0 + 0.1 * jnp.abs(jax.random.normal(ks[6], (P,), jnp.float32))
    g2 = jnp.ones((P,), jnp.float32)
    be2 = jnp.zeros((P,), jnp.float32)
    rm2 = 0.02 * jax.random.normal(ks[7], (P,), jnp.float32)
    rv2 = jnp.ones((P,), jnp.float32)

    fn = jax.jit(basic_block_pallas)
    out = fn(x, w1, g1, be1, rm1, rv1, w2, g2, be2, rm2, rv2)
    out = jax.block_until_ready(out)

    ref = _reference(x, w1, g1, be1, rm1, rv1, w2, g2, be2, rm2, rv2)
    assert out.shape == (N, C, H, W)
    assert jnp.allclose(out, ref, atol=1e-3, rtol=1e-3), (
        float(jnp.max(jnp.abs(out - ref))))

    print("KERNEL_OK")
</pallas_src>

<mosaic_0001>
module attributes {stable_mosaic.version = 11 : i64} {
  func.func @_basic_block_kernel(%arg0: i32, %arg1: memref<1x16x128xf32, #tpu.memory_space<vmem>>, %arg2: memref<3x128x128xf32, #tpu.memory_space<vmem>>, %arg3: memref<1x128xf32, #tpu.memory_space<vmem>>, %arg4: memref<3x128x128xf32, #tpu.memory_space<vmem>>, %arg5: memref<1x128xf32, #tpu.memory_space<vmem>>, %arg6: memref<1x16x128xf32, #tpu.memory_space<vmem>>, %arg7: memref<18x128xf32, #tpu.memory_space<vmem>>) attributes {dimension_semantics = [#tpu.dimension_semantics<parallel>], iteration_bounds = array<i64: 2>, scalar_prefetch = 0 : i64, scratch_operands = 1 : i64, tpu.core_type = #tpu.core_type<tc>, window_params = [{transform_indices = @transform_0, window_bounds = array<i64: 1, 16, 128>}, {pipeline_mode = #tpu.pipeline_mode<synchronous>, transform_indices = @transform_1, window_bounds = array<i64: 3, 128, 128>}, {pipeline_mode = #tpu.pipeline_mode<synchronous>, transform_indices = @transform_2, window_bounds = array<i64: 1, 128>}, {pipeline_mode = #tpu.pipeline_mode<synchronous>, transform_indices = @transform_3, window_bounds = array<i64: 3, 128, 128>}, {pipeline_mode = #tpu.pipeline_mode<synchronous>, transform_indices = @transform_4, window_bounds = array<i64: 1, 128>}, {transform_indices = @transform_5, window_bounds = array<i64: 1, 16, 128>}]} {
    %cst = arith.constant 0.000000e+00 : f32
    %0 = vector.broadcast %cst : f32 to vector<1x128xf32>
    %c0 = arith.constant 0 : index
    %c0_0 = arith.constant 0 : index
    %1 = vector.load %arg7[%c0, %c0_0] : memref<18x128xf32, #tpu.memory_space<vmem>>, vector<1x128xf32>
    tpu.vector_store %arg7[%c0, %c0_0], %0 {strides = array<i32>} : memref<18x128xf32, #tpu.memory_space<vmem>>, vector<1x128xf32>,
    %c17 = arith.constant 17 : index
    %c0_1 = arith.constant 0 : index
    %2 = vector.load %arg7[%c17, %c0_1] : memref<18x128xf32, #tpu.memory_space<vmem>>, vector<1x128xf32>
    tpu.vector_store %arg7[%c17, %c0_1], %0 {strides = array<i32>} : memref<18x128xf32, #tpu.memory_space<vmem>>, vector<1x128xf32>,
    %c0_2 = arith.constant 0 : index
    %c0_3 = arith.constant 0 : index
    %c0_4 = arith.constant 0 : index
    %3 = vector.load %arg1[%c0_2, %c0_3, %c0_4] : memref<1x16x128xf32, #tpu.memory_space<vmem>>, vector<1x16x128xf32>
    %4 = vector.shape_cast %3 : vector<1x16x128xf32> to vector<16x128xf32>
    %c1 = arith.constant 1 : index
    %c0_5 = arith.constant 0 : index
    %5 = vector.load %arg7[%c1, %c0_5] : memref<18x128xf32, #tpu.memory_space<vmem>>, vector<16x128xf32>
    tpu.vector_store %arg7[%c1, %c0_5], %4 {strides = array<i32>} : memref<18x128xf32, #tpu.memory_space<vmem>>, vector<16x128xf32>,
    %cst_6 = arith.constant 0.000000e+00 : f32
    %6 = vector.broadcast %cst_6 : f32 to vector<16x128xf32>
    %c0_7 = arith.constant 0 : index
    %c0_8 = arith.constant 0 : index
    %7 = vector.load %arg7[%c0_7, %c0_8] : memref<18x128xf32, #tpu.memory_space<vmem>>, vector<16x128xf32>
    %c0_9 = arith.constant 0 : index
    %c0_10 = arith.constant 0 : index
    %c0_11 = arith.constant 0 : index
    %8 = vector.load %arg2[%c0_9, %c0_10, %c0_11] : memref<3x128x128xf32, #tpu.memory_space<vmem>>, vector<1x128x128xf32>
    %9 = vector.shape_cast %8 : vector<1x128x128xf32> to vector<128x128xf32>
    %cst_12 = arith.constant dense<0.000000e+00> : vector<16x128xf32>
    %10 = tpu.matmul %7, %9, %cst_12 {dimension_numbers = #tpu.dot_dimension_numbers<[1], [0], [0], [1], [0, 0, 1, 1], [], []>} : vector<16x128xf32>, vector<128x128xf32>, vector<16x128xf32> -> vector<16x128xf32>
    %11 = arith.addf %6, %10 : vector<16x128xf32>
    %c1_13 = arith.constant 1 : index
    %c0_14 = arith.constant 0 : index
    %12 = vector.load %arg7[%c1_13, %c0_14] : memref<18x128xf32, #tpu.memory_space<vmem>>, vector<16x128xf32>
    %c1_15 = arith.constant 1 : index
    %c0_16 = arith.constant 0 : index
    %c0_17 = arith.constant 0 : index
    %13 = vector.load %arg2[%c1_15, %c0_16, %c0_17] : memref<3x128x128xf32, #tpu.memory_space<vmem>>, vector<1x128x128xf32>
    %14 = vector.shape_cast %13 : vector<1x128x128xf32> to vector<128x128xf32>
    %cst_18 = arith.constant dense<0.000000e+00> : vector<16x128xf32>
    %15 = tpu.matmul %12, %14, %cst_18 {dimension_numbers = #tpu.dot_dimension_numbers<[1], [0], [0], [1], [0, 0, 1, 1], [], []>} : vector<16x128xf32>, vector<128x128xf32>, vector<16x128xf32> -> vector<16x128xf32>
    %16 = arith.addf %11, %15 : vector<16x128xf32>
    %c2 = arith.constant 2 : index
    %c0_19 = arith.constant 0 : index
    %17 = vector.load %arg7[%c2, %c0_19] : memref<18x128xf32, #tpu.memory_space<vmem>>, vector<16x128xf32>
    %c2_20 = arith.constant 2 : index
    %c0_21 = arith.constant 0 : index
    %c0_22 = arith.constant 0 : index
    %18 = vector.load %arg2[%c2_20, %c0_21, %c0_22] : memref<3x128x128xf32, #tpu.memory_space<vmem>>, vector<1x128x128xf32>
    %19 = vector.shape_cast %18 : vector<1x128x128xf32> to vector<128x128xf32>
    %cst_23 = arith.constant dense<0.000000e+00> : vector<16x128xf32>
    %20 = tpu.matmul %17, %19, %cst_23 {dimension_numbers = #tpu.dot_dimension_numbers<[1], [0], [0], [1], [0, 0, 1, 1], [], []>} : vector<16x128xf32>, vector<128x128xf32>, vector<16x128xf32> -> vector<16x128xf32>
    %21 = arith.addf %16, %20 : vector<16x128xf32>
    %c0_24 = arith.constant 0 : index
    %c0_25 = arith.constant 0 : index
    %22 = vector.load %arg3[%c0_24, %c0_25] : memref<1x128xf32, #tpu.memory_space<vmem>>, vector<1x128xf32>
    %23 = vector.broadcast %22 : vector<1x128xf32> to vector<16x128xf32>
    %24 = arith.addf %21, %23 : vector<16x128xf32>
    %cst_26 = arith.constant 0.000000e+00 : f32
    %25 = vector.broadcast %cst_26 : f32 to vector<16x128xf32>
    %26 = arith.maximumf %24, %25 : vector<16x128xf32>
    %c1_27 = arith.constant 1 : index
    %c0_28 = arith.constant 0 : index
    %27 = vector.load %arg7[%c1_27, %c0_28] : memref<18x128xf32, #tpu.memory_space<vmem>>, vector<16x128xf32>
    tpu.vector_store %arg7[%c1_27, %c0_28], %26 {strides = array<i32>} : memref<18x128xf32, #tpu.memory_space<vmem>>, vector<16x128xf32>,
    %cst_29 = arith.constant 0.000000e+00 : f32
    %28 = vector.broadcast %cst_29 : f32 to vector<16x128xf32>
    %c0_30 = arith.constant 0 : index
    %c0_31 = arith.constant 0 : index
    %29 = vector.load %arg7[%c0_30, %c0_31] : memref<18x128xf32, #tpu.memory_space<vmem>>, vector<16x128xf32>
    %c0_32 = arith.constant 0 : index
    %c0_33 = arith.constant 0 : index
    %c0_34 = arith.constant 0 : index
    %30 = vector.load %arg4[%c0_32, %c0_33, %c0_34] : memref<3x128x128xf32, #tpu.memory_space<vmem>>, vector<1x128x128xf32>
    %31 = vector.shape_cast %30 : vector<1x128x128xf32> to vector<128x128xf32>
    %cst_35 = arith.constant dense<0.000000e+00> : vector<16x128xf32>
    %32 = tpu.matmul %29, %31, %cst_35 {dimension_numbers = #tpu.dot_dimension_numbers<[1], [0], [0], [1], [0, 0, 1, 1], [], []>} : vector<16x128xf32>, vector<128x128xf32>, vector<16x128xf32> -> vector<16x128xf32>
    %33 = arith.addf %28, %32 : vector<16x128xf32>
    %c1_36 = arith.constant 1 : index
    %c0_37 = arith.constant 0 : index
    %34 = vector.load %arg7[%c1_36, %c0_37] : memref<18x128xf32, #tpu.memory_space<vmem>>, vector<16x128xf32>
    %c1_38 = arith.constant 1 : index
    %c0_39 = arith.constant 0 : index
    %c0_40 = arith.constant 0 : index
    %35 = vector.load %arg4[%c1_38, %c0_39, %c0_40] : memref<3x128x128xf32, #tpu.memory_space<vmem>>, vector<1x128x128xf32>
    %36 = vector.shape_cast %35 : vector<1x128x128xf32> to vector<128x128xf32>
    %cst_41 = arith.constant dense<0.000000e+00> : vector<16x128xf32>
    %37 = tpu.matmul %34, %36, %cst_41 {dimension_numbers = #tpu.dot_dimension_numbers<[1], [0], [0], [1], [0, 0, 1, 1], [], []>} : vector<16x128xf32>, vector<128x128xf32>, vector<16x128xf32> -> vector<16x128xf32>
    %38 = arith.addf %33, %37 : vector<16x128xf32>
    %c2_42 = arith.constant 2 : index
    %c0_43 = arith.constant 0 : index
    %39 = vector.load %arg7[%c2_42, %c0_43] : memref<18x128xf32, #tpu.memory_space<vmem>>, vector<16x128xf32>
    %c2_44 = arith.constant 2 : index
    %c0_45 = arith.constant 0 : index
    %c0_46 = arith.constant 0 : index
    %40 = vector.load %arg4[%c2_44, %c0_45, %c0_46] : memref<3x128x128xf32, #tpu.memory_space<vmem>>, vector<1x128x128xf32>
    %41 = vector.shape_cast %40 : vector<1x128x128xf32> to vector<128x128xf32>
    %cst_47 = arith.constant dense<0.000000e+00> : vector<16x128xf32>
    %42 = tpu.matmul %39, %41, %cst_47 {dimension_numbers = #tpu.dot_dimension_numbers<[1], [0], [0], [1], [0, 0, 1, 1], [], []>} : vector<16x128xf32>, vector<128x128xf32>, vector<16x128xf32> -> vector<16x128xf32>
    %43 = arith.addf %38, %42 : vector<16x128xf32>
    %c0_48 = arith.constant 0 : index
    %c0_49 = arith.constant 0 : index
    %44 = vector.load %arg5[%c0_48, %c0_49] : memref<1x128xf32, #tpu.memory_space<vmem>>, vector<1x128xf32>
    %45 = vector.broadcast %44 : vector<1x128xf32> to vector<16x128xf32>
    %46 = arith.addf %43, %45 : vector<16x128xf32>
    %47 = arith.addf %46, %4 : vector<16x128xf32>
    %cst_50 = arith.constant 0.000000e+00 : f32
    %48 = vector.broadcast %cst_50 : f32 to vector<16x128xf32>
    %49 = arith.maximumf %47, %48 : vector<16x128xf32>
    %c0_51 = arith.constant 0 : index
    %c0_52 = arith.constant 0 : index
    %c0_53 = arith.constant 0 : index
    %50 = vector.load %arg6[%c0_51, %c0_52, %c0_53] : memref<1x16x128xf32, #tpu.memory_space<vmem>>, vector<1x16x128xf32>
    %51 = vector.shape_cast %50 : vector<1x16x128xf32> to vector<16x128xf32>
    %52 = vector.shape_cast %49 : vector<16x128xf32> to vector<1x16x128xf32>
    tpu.vector_store %arg6[%c0_51, %c0_52, %c0_53], %52 {strides = array<i32>} : memref<1x16x128xf32, #tpu.memory_space<vmem>>, vector<1x16x128xf32>,
    return
  }
  func.func @transform_0(%arg0: i32) -> (i32, i32, i32) {
    %c0_i32 = arith.constant 0 : i32
    %c0_i32_0 = arith.constant 0 : i32
    %c0_i32_1 = arith.constant 0 : i32
    return %arg0, %c0_i32, %c0_i32_0 : i32, i32, i32
  }
  func.func @transform_1(%arg0: i32) -> (i32, i32, i32) {
    %c0_i32 = arith.constant 0 : i32
    %c0_i32_0 = arith.constant 0 : i32
    %c0_i32_1 = arith.constant 0 : i32
    %c0_i32_2 = arith.constant 0 : i32
    return %c0_i32, %c0_i32_0, %c0_i32_1 : i32, i32, i32
  }
  func.func @transform_2(%arg0: i32) -> (i32, i32) {
    %c0_i32 = arith.constant 0 : i32
    %c0_i32_0 = arith.constant 0 : i32
    %c0_i32_1 = arith.constant 0 : i32
    return %c0_i32, %c0_i32_0 : i32, i32
  }
  func.func @transform_3(%arg0: i32) -> (i32, i32, i32) {
    %c0_i32 = arith.constant 0 : i32
    %c0_i32_0 = arith.constant 0 : i32
    %c0_i32_1 = arith.constant 0 : i32
    %c0_i32_2 = arith.constant 0 : i32
    return %c0_i32, %c0_i32_0, %c0_i32_1 : i32, i32, i32
  }
  func.func @transform_4(%arg0: i32) -> (i32, i32) {
    %c0_i32 = arith.constant 0 : i32
    %c0_i32_0 = arith.constant 0 : i32
    %c0_i32_1 = arith.constant 0 : i32
    return %c0_i32, %c0_i32_0 : i32, i32
  }
  func.func @transform_5(%arg0: i32) -> (i32, i32, i32) {
    %c0_i32 = arith.constant 0 : i32
    %c0_i32_0 = arith.constant 0 : i32
    %c0_i32_1 = arith.constant 0 : i32
    return %arg0, %c0_i32, %c0_i32_0 : i32, i32, i32
  }
}

</mosaic_0001>

<llo_original>
// kernel: tile.13
$region0: #{tile.13}
  #allocation0 [shape = 's32[1]{0}', space=sflag, size = 0x4, scoped, tag = 'scoped memory for tile.13']
  %s0 = inlined_call_operand.vmem [shape: f32[8], index: 0, kind: input, shape index: {}]
  %s1 = inlined_call_operand.vmem [shape: f32[16,8], index: 1, kind: output, shape index: {}]
  // Predicated region
  $region2: #{tile.13} parent=0 // pred_check
    _
  $region3: #{tile.13} parent=0 // pred_check_branch
    %3 = sbr.rel (0) target = $region5
  $region4: #{tile.13} parent=0 // pred_region
    _
  $region5: #{tile.13} parent=0 // pred_fallthru
    _
  %v4 = vld [vmem:[%s0] ss:$0 sm:$0xff]
  %5 = vst [vmem:[%s1] sm:$0xff] %v4
  %s6 = scalar_lea.vmem %s1, 8
  %7 = vst [vmem:[%s6] sm:$0xff] %v4

// kernel: tile.14
$region0: #{tile.14}
  %s0 = inlined_call_operand.vmem [shape: f32[16,8], index: 0, kind: input, shape index: {}]
  %s1 = inlined_call_operand.vmem [shape: f32[1,128], index: 1, kind: output, shape index: {}]
  $region1: #{tile.14} parent=0
    #allocation0 [shape = 'u8[4096]{0}', space=vmem, size = 0x1000, scoped, tag = 'scoped mem for output reshape']
    %v2 = vld [vmem:[%s0] sm:$0x1]
    %vm3 = vcmask 64512
    %4 = vst.msk [vmem:[#allocation0] sm:$0x1] %vm3, %v2
    %s5 = scalar_lea.vmem %s0, 15
    %v6 = vld [vmem:[%s5] sm:$0x1]
    %7 = vrot.lane.b32.xlu0 %v6, 120
    %v8 = vpop.permute.xlu0 %7
    %vm9 = vcmask 1048512
    %10 = vst.msk [vmem:[#allocation0] sm:$0x1] %vm9, %v8
    %s11 = scalar_lea.vmem %s0, 14
    %v12 = vld [vmem:[%s11] sm:$0x1]
    %13 = vrot.lane.b32.xlu0 %v12, 112
    %v14 = vpop.permute.xlu0 %13
    %vm15 = vcmask 982912
    %16 = vst.msk [vmem:[#allocation0] sm:$0x1] %vm15, %v14
    %s17 = scalar_lea.vmem %s0, 13
    %v18 = vld [vmem:[%s17] sm:$0x1]
    %19 = vrot.lane.b32.xlu0 %v18, 104
    %v20 = vpop.permute.xlu0 %19
    %vm21 = vcmask 917312
    %22 = vst.msk [vmem:[#allocation0] sm:$0x1] %vm21, %v20
    %s23 = scalar_lea.vmem %s0, 12
    %v24 = vld [vmem:[%s23] sm:$0x1]
    %25 = vrot.lane.b32.xlu0 %v24, 96
    %v26 = vpop.permute.xlu0 %25
    %vm27 = vcmask 851712
    %28 = vst.msk [vmem:[#allocation0] sm:$0x1] %vm27, %v26
    %s29 = scalar_lea.vmem %s0, 11
    %v30 = vld [vmem:[%s29] sm:$0x1]
    %31 = vrot.lane.b32.xlu0 %v30, 88
    %v32 = vpop.permute.xlu0 %31
    %vm33 = vcmask 786112
    %34 = vst.msk [vmem:[#allocation0] sm:$0x1] %vm33, %v32
    %s35 = scalar_lea.vmem %s0, 10
    %v36 = vld [vmem:[%s35] sm:$0x1]
    %37 = vrot.lane.b32.xlu0 %v36, 80
    %v38 = vpop.permute.xlu0 %37
    %vm39 = vcmask 720512
    %40 = vst.msk [vmem:[#allocation0] sm:$0x1] %vm39, %v38
    %s41 = scalar_lea.vmem %s0, 9
    %v42 = vld [vmem:[%s41] sm:$0x1]
    %43 = vrot.lane.b32.xlu0 %v42, 72
    %v44 = vpop.permute.xlu0 %43
    %vm45 = vcmask 654912
    %46 = vst.msk [vmem:[#allocation0] sm:$0x1] %vm45, %v44
    %s47 = scalar_lea.vmem %s0, 8
    %v48 = vld [vmem:[%s47] sm:$0x1]
    %49 = vrot.lane.b32.xlu0 %v48, 64
    %v50 = vpop.permute.xlu0 %49
    %vm51 = vcmask 589312
    %52 = vst.msk [vmem:[#allocation0] sm:$0x1] %vm51, %v50
    %s53 = scalar_lea.vmem %s0, 7
    %v54 = vld [vmem:[%s53] sm:$0x1]
    %55 = vrot.lane.b32.xlu0 %v54, 56
    %v56 = vpop.permute.xlu0 %55
    %vm57 = vcmask 523712
    %58 = vst.msk [vmem:[#allocation0] sm:$0x1] %vm57, %v56
    %s59 = scalar_lea.vmem %s0, 6
    %v60 = vld [vmem:[%s59] sm:$0x1]
    %61 = vrot.lane.b32.xlu0 %v60, 48
    %v62 = vpop.permute.xlu0 %61
    %vm63 = vcmask 458112
    %64 = vst.msk [vmem:[#allocation0] sm:$0x1] %vm63, %v62
    %s65 = scalar_lea.vmem %s0, 5
    %v66 = vld [vmem:[%s65] sm:$0x1]
    %67 = vrot.lane.b32.xlu0 %v66, 40
    %v68 = vpop.permute.xlu0 %67
    %vm69 = vcmask 392512
    %70 = vst.msk [vmem:[#allocation0] sm:$0x1] %vm69, %v68
    %s71 = scalar_lea.vmem %s0, 4
    %v72 = vld [vmem:[%s71] sm:$0x1]
    %73 = vrot.lane.b32.xlu0 %v72, 32
    %v74 = vpop.permute.xlu0 %73
    %vm75 = vcmask 326912
    %76 = vst.msk [vmem:[#allocation0] sm:$0x1] %vm75, %v74
    %s77 = scalar_lea.vmem %s0, 3
    %v78 = vld [vmem:[%s77] sm:$0x1]
    %79 = vrot.lane.b32.xlu0 %v78, 24
    %v80 = vpop.permute.xlu0 %79
    %vm81 = vcmask 261312
    %82 = vst.msk [vmem:[#allocation0] sm:$0x1] %vm81, %v80
    %s83 = scalar_lea.vmem %s0, 2
    %v84 = vld [vmem:[%s83] sm:$0x1]
    %85 = vrot.lane.b32.xlu0 %v84, 16
    %v86 = vpop.permute.xlu0 %85
    %vm87 = vcmask 195712
    %88 = vst.msk [vmem:[#allocation0] sm:$0x1] %vm87, %v86
    %s89 = scalar_lea.vmem %s0, 1
    %v90 = vld [vmem:[%s89] sm:$0x1]
    %91 = vrot.lane.b32.xlu0 %v90, 8
    %v92 = vpop.permute.xlu0 %91
    %vm93 = vcmask 130112
    %94 = vst.msk [vmem:[#allocation0] sm:$0x1] %vm93, %v92
    %s96 = sshllo.u32 0, 1
    %v98 = vld [vmem:[#allocation0] sm:%s96]
    %s99 = sshllo.u32 0, 1
    %100 = vst [vmem:[%s1] sm:%s99] %v98

// kernel: basic_block_pallas.1
$region0: #{basic_block_pallas.1}
  #allocation0 [shape = 'u32[]', space=smem, size = 0x4, offset = 0x4, fixed_abs, tag = 'smem constant byte address 0x4 - core index']
  #allocation1 [shape = 'u32[144,128]{1,0:T(1,128)}', space=vmem, size = 0x12000, scoped, tag = 'internal scratch']
  #allocation2 [shape = 'f32[18,128]{1,0:T(8,128)}', space=vmem, size = 0x3000, scoped, tag = 'scratch operand']
  %s0 = inlined_call_operand.vmem [shape: f32[2,16,128], index: 0, kind: input, shape index: {}]
  %s1 = inlined_call_operand.vmem [shape: f32[3,128,128], index: 1, kind: input, shape index: {}]
  %s2 = inlined_call_operand.vmem [shape: f32[1,128], index: 2, kind: input, shape index: {}]
  %s3 = inlined_call_operand.vmem [shape: f32[3,128,128], index: 3, kind: input, shape index: {}]
  %s4 = inlined_call_operand.vmem [shape: f32[1,128], index: 4, kind: input, shape index: {}]
  %s5 = inlined_call_operand.vmem [shape: f32[2,16,128], index: 5, kind: output, shape index: {}]
  %s6 = sld [smem:[#allocation0]]
  $region53: #{basic_block_pallas.1} parent=0
    _
  %s8 = ssub.s32 1, %s6
  %s9 = scalar_select 0, %s8, %s6
  loop: start=0, step=1, limit=4
  $region2: #{basic_block_pallas.1} parent=0 // loop_pre_header
    _
  $region3: #{basic_block_pallas.1} parent=0 // loop_header
    %s11 = sphi 0, %s15
    %p12 = scmp.ge.s32.totalorder %s11, 4
    %s21 = sphi 0, %s23
    %s24 = sphi 0, %s21
    %s25 = sphi 0, %s24
    %s41 = sphi 0, %s25
    %s45 = sphi 0, %s45
    %s47 = sphi 0, %s45
    %s48 = sphi 0, %s47
    %s62 = sphi 0, %s48
    %s66 = sphi 0, %s66
    %s68 = sphi 0, %s66
    %s69 = sphi 0, %s68
    %s83 = sphi 0, %s69
    %s87 = sphi 0, %s87
    %s89 = sphi 0, %s87
    %s90 = sphi 0, %s89
    %s104 = sphi 0, %s90
    %s108 = sphi 0, %s108
    %s110 = sphi 0, %s108
    %s111 = sphi 0, %s110
    %s125 = sphi 0, %s111
    %s131 = sphi 0, %s133
    %s134 = sphi 0, %s131
    %s135 = sphi 0, %s134
    %s151 = sphi 0, %s135
  $region4: #{basic_block_pallas.1} parent=0 // loop_header_branch
    %14 = sbr.rel (%p12) target = $region8
  $region5: #{basic_block_pallas.1} parent=0 // loop_body
    %s16 = ssub.s32 %s11, 1
    %s17 = ssub.s32 %s11, 2
    %s18 = sadd.s32 %s11, 1
    %s19 = ssub.s32 %s11, %s18
    %p20 = scmp.eq.s32.totalorder %s19, 0
    %s22 = sadd.s32 %s21, 1
    %s23 = scalar_select %p20, %s21, %s22
    %p26 = pneg %p20
    %p27 = scmp.eq.s32.totalorder %s11, 1
    %p28 = por %p26, %p27
    %p29 = scmp.ne.s32.totalorder %s21, %s24
    %p30 = scmp.eq.s32.totalorder %s11, 0
    %p31 = por %p29, %p30
    %p32 = scmp.ne.s32.totalorder %s21, %s24
    %p33 = scmp.eq.s32.totalorder %s16, 1
    %p34 = por %p32, %p33
    %p35 = scmp.ne.s32.totalorder %s24, %s25
    %p36 = scmp.eq.s32.totalorder %s16, 0
    %p37 = por %p35, %p36
    %p38 = scmp.ne.s32.totalorder %s24, %s25
    %p39 = scmp.eq.s32.totalorder %s17, 1
    %p40 = por %p38, %p39
    %p42 = scmp.ne.s32.totalorder %s25, %s41
    %p43 = scmp.eq.s32.totalorder %s17, 0
    %p44 = por %p42, %p43
    %s46 = sadd.s32 %s45, 1
    %p49 = scmp.eq.s32.totalorder %s11, 1
    %p50 = scmp.ne.s32.totalorder %s45, %s47
    %p51 = scmp.eq.s32.totalorder %s11, 0
    %p52 = por %p50, %p51
    %p53 = scmp.ne.s32.totalorder %s45, %s47
    %p54 = scmp.eq.s32.totalorder %s16, 1
    %p55 = por %p53, %p54
    %p56 = scmp.ne.s32.totalorder %s47, %s48
    %p57 = scmp.eq.s32.totalorder %s16, 0
    %p58 = por %p56, %p57
    %p59 = scmp.ne.s32.totalorder %s47, %s48
    %p60 = scmp.eq.s32.totalorder %s17, 1
    %p61 = por %p59, %p60
    %p63 = scmp.ne.s32.totalorder %s48, %s62
    %p64 = scmp.eq.s32.totalorder %s17, 0
    %p65 = por %p63, %p64
    %s67 = sadd.s32 %s66, 1
    %p70 = scmp.eq.s32.totalorder %s11, 1
    %p71 = scmp.ne.s32.totalorder %s66, %s68
    %p72 = scmp.eq.s32.totalorder %s11, 0
    %p73 = por %p71, %p72
    %p74 = scmp.ne.s32.totalorder %s66, %s68
    %p75 = scmp.eq.s32.totalorder %s16, 1
    %p76 = por %p74, %p75
    %p77 = scmp.ne.s32.totalorder %s68, %s69
    %p78 = scmp.eq.s32.totalorder %s16, 0
    %p79 = por %p77, %p78
    %p80 = scmp.ne.s32.totalorder %s68, %s69
    %p81 = scmp.eq.s32.totalorder %s17, 1
    %p82 = por %p80, %p81
    %p84 = scmp.ne.s32.totalorder %s69, %s83
    %p85 = scmp.eq.s32.totalorder %s17, 0
    %p86 = por %p84, %p85
    %s88 = sadd.s32 %s87, 1
    %p91 = scmp.eq.s32.totalorder %s11, 1
    %p92 = scmp.ne.s32.totalorder %s87, %s89
    %p93 = scmp.eq.s32.totalorder %s11, 0
    %p94 = por %p92, %p93
    %p95 = scmp.ne.s32.totalorder %s87, %s89
    %p96 = scmp.eq.s32.totalorder %s16, 1
    %p97 = por %p95, %p96
    %p98 = scmp.ne.s32.totalorder %s89, %s90
    %p99 = scmp.eq.s32.totalorder %s16, 0
    %p100 = por %p98, %p99
    %p101 = scmp.ne.s32.totalorder %s89, %s90
    %p102 = scmp.eq.s32.totalorder %s17, 1
    %p103 = por %p101, %p102
    %p105 = scmp.ne.s32.totalorder %s90, %s104
    %p106 = scmp.eq.s32.totalorder %s17, 0
    %p107 = por %p105, %p106
    %s109 = sadd.s32 %s108, 1
    %p112 = scmp.eq.s32.totalorder %s11, 1
    %p113 = scmp.ne.s32.totalorder %s108, %s110
    %p114 = scmp.eq.s32.totalorder %s11, 0
    %p115 = por %p113, %p114
    %p116 = scmp.ne.s32.totalorder %s108, %s110
    %p117 = scmp.eq.s32.totalorder %s16, 1
    %p118 = por %p116, %p117
    %p119 = scmp.ne.s32.totalorder %s110, %s111
    %p120 = scmp.eq.s32.totalorder %s16, 0
    %p121 = por %p119, %p120
    %p122 = scmp.ne.s32.totalorder %s110, %s111
    %p123 = scmp.eq.s32.totalorder %s17, 1
    %p124 = por %p122, %p123
    %p126 = scmp.ne.s32.totalorder %s111, %s125
    %p127 = scmp.eq.s32.totalorder %s17, 0
    %p128 = por %p126, %p127
    %s129 = ssub.s32 %s11, %s18
    %p130 = scmp.eq.s32.totalorder %s129, 0
    %s132 = sadd.s32 %s131, 1
    %s133 = scalar_select %p130, %s131, %s132
    %p136 = pneg %p130
    %p137 = scmp.eq.s32.totalorder %s11, 1
    %p138 = por %p136, %p137
    %p139 = scmp.ne.s32.totalorder %s131, %s134
    %p140 = scmp.eq.s32.totalorder %s11, 0
    %p141 = por %p139, %p140
    %p142 = scmp.ne.s32.totalorder %s131, %s134
    %p143 = scmp.eq.s32.totalorder %s16, 1
    %p144 = por %p142, %p143
    %p145 = scmp.ne.s32.totalorder %s134, %s135
    %p146 = scmp.eq.s32.totalorder %s16, 0
    %p147 = por %p145, %p146
    %p148 = scmp.ne.s32.totalorder %s134, %s135
    %p149 = scmp.eq.s32.totalorder %s17, 1
    %p150 = por %p148, %p149
    %p152 = scmp.ne.s32.totalorder %s135, %s151
    %p153 = scmp.eq.s32.totalorder %s17, 0
    %p154 = por %p152, %p153
    %p155 = scmp.le.s32.totalorder 1, %s11
    %p156 = scmp.lt.s32.totalorder %s11, 3
    %p157 = pnand %p155, %p156
    %p158 = pneg %p157
    // Predicated region
    $region9: #{basic_block_pallas.1} parent=5 // pred_check
      _
    $region10: #{basic_block_pallas.1} parent=5 // pred_check_branch
      %160 = sbr.rel (%p157) target = $region12
    $region11: #{basic_block_pallas.1} parent=5 // pred_region
      %s161 = ssub.s32 %s11, 1
      // Predicated region
      $region13: #{basic_block_pallas.1} parent=11 // pred_check
        %p162 = pneg %p58
      $region14: #{basic_block_pallas.1} parent=11 // pred_check_branch
        %164 = sbr.rel (%p162) target = $region16
      $region15: #{basic_block_pallas.1} parent=11 // pred_region
        _
      $region16: #{basic_block_pallas.1} parent=11 // pred_fallthru
        _
      // Predicated region
      $region17: #{basic_block_pallas.1} parent=11 // pred_check
        %p165 = pneg %p79
      $region18: #{basic_block_pallas.1} parent=11 // pred_check_branch
        %167 = sbr.rel (%p165) target = $region20
      $region19: #{basic_block_pallas.1} parent=11 // pred_region
        _
      $region20: #{basic_block_pallas.1} parent=11 // pred_fallthru
        _
      // Predicated region
      $region21: #{basic_block_pallas.1} parent=11 // pred_check
        %p168 = pneg %p100
      $region22: #{basic_block_pallas.1} parent=11 // pred_check_branch
        %170 = sbr.rel (%p168) target = $region24
      $region23: #{basic_block_pallas.1} parent=11 // pred_region
        _
      $region24: #{basic_block_pallas.1} parent=11 // pred_fallthru
        _
      // Predicated region
      $region25: #{basic_block_pallas.1} parent=11 // pred_check
        %p171 = pneg %p121
      $region26: #{basic_block_pallas.1} parent=11 // pred_check_branch
        %173 = sbr.rel (%p171) target = $region28
      $region27: #{basic_block_pallas.1} parent=11 // pred_region
        _
      $region28: #{basic_block_pallas.1} parent=11 // pred_fallthru
        _
    $region12: #{basic_block_pallas.1} parent=5 // pred_fallthru
      _
    %p174 = scmp.lt.s32.totalorder %s11, 2
    // Predicated region
    $region29: #{basic_block_pallas.1} parent=5 // pred_check
      %p175 = pneg %p174
    $region30: #{basic_block_pallas.1} parent=5 // pred_check_branch
      %177 = sbr.rel (%p175) target = $region32
    $region31: #{basic_block_pallas.1} parent=5 // pred_region
      // Predicated region
      $region33: #{basic_block_pallas.1} parent=31 // pred_check
        %p178 = pneg %p31
      $region34: #{basic_block_pallas.1} parent=31 // pred_check_branch
        %180 = sbr.rel (%p178) target = $region36
      $region35: #{basic_block_pallas.1} parent=31 // pred_region
        %p181 = scmp.lt.s32.totalorder %s11, 1
        %s182 = scalar_select %p181, %s11, 1
        %s183 = smul.addr %s182, 2
        %s184 = smul.addr %s183, 8
        %s185 = scalar_lea.vmem %s0, %s184
      $region36: #{basic_block_pallas.1} parent=31 // pred_fallthru
        _
    $region32: #{basic_block_pallas.1} parent=5 // pred_fallthru
      _
    %p186 = scmp.le.s32.totalorder 1, %s11
    %p187 = scmp.lt.s32.totalorder %s11, 3
    %p188 = pnand %p186, %p187
    %p189 = pneg %p188
    // Predicated region
    $region37: #{basic_block_pallas.1} parent=5 // pred_check
      _
    $region38: #{basic_block_pallas.1} parent=5 // pred_check_branch
      %191 = sbr.rel (%p188) target = $region40
    $region39: #{basic_block_pallas.1} parent=5 // pred_region
      %s192 = ssub.s32 %s11, 1
      %p193 = scmp.lt.s32.totalorder %s16, 1
      %s194 = scalar_select %p193, %s16, 1
      %s195 = smul.addr %s194, 2
      %s196 = smul.addr %s195, 8
      %s197 = scalar_lea.vmem %s0, %s196
      %p198 = pneg %p37
      %p199 = pneg %p34
      %p200 = pneg %p58
      %p201 = pneg %p55
      %p202 = pneg %p79
      %p203 = pneg %p76
      %p204 = pneg %p100
      %p205 = pneg %p97
      %p206 = pneg %p121
      %p207 = pneg %p118
      %p208 = pneg %p147
      %p209 = pneg %p144
      %p210 = scmp.lt.s32.totalorder %s16, 1
      %s211 = scalar_select %p210, %s16, 1
      %s212 = smul.addr %s211, 2
      %s213 = smul.addr %s212, 8
      %s214 = scalar_lea.vmem %s5, %s213
      %p215 = scmp.lt.s32.totalorder %s16, 1
      %s216 = scalar_select %p215, %s16, 1
      %s217 = smul.addr %s216, 2
      %s218 = smul.addr %s217, 8
      %s219 = scalar_lea.vmem %s0, %s218
      %p220 = scmp.lt.s32.totalorder %s16, 1
      %s221 = scalar_select %p220, %s16, 1
      %s222 = smul.addr %s221, 2
      %s223 = smul.addr %s222, 8
      %s224 = scalar_lea.vmem %s5, %s223
      %225 = vst [vmem:[#allocation2] sm:$0x1] 0.0
      %226 = vst [vmem:[#allocation2 + $0x11] sm:$0x1] 0.0
      %v227 = vld [vmem:[%s219] sm:$0xff]
      %v228 = vld [vmem:[%s219 + $0x8] sm:$0xff]
      %229 = vst [vmem:[#allocation2 + $0x1] sm:$0xff] %v227
      %230 = vst [vmem:[#allocation2 + $0x9] sm:$0xff] %v228
      %v231 = vld [vmem:[#allocation2] sm:$0xff]
      %v232 = vld [vmem:[#allocation2 + $0x8] sm:$0xff]
      %v233 = vld [vmem:[%s1] sm:$0xff]
      %v234 = vld [vmem:[%s1 + $0x8] sm:$0xff]
      %v235 = vld [vmem:[%s1 + $0x10] sm:$0xff]
      %v236 = vld [vmem:[%s1 + $0x18] sm:$0xff]
      %v237 = vld [vmem:[%s1 + $0x20] sm:$0xff]
      %v238 = vld [vmem:[%s1 + $0x28] sm:$0xff]
      %v239 = vld [vmem:[%s1 + $0x30] sm:$0xff]
      %v240 = vld [vmem:[%s1 + $0x38] sm:$0xff]
      %v241 = vld [vmem:[%s1 + $0x40] sm:$0xff]
      %v242 = vld [vmem:[%s1 + $0x48] sm:$0xff]
      %v243 = vld [vmem:[%s1 + $0x50] sm:$0xff]
      %v244 = vld [vmem:[%s1 + $0x58] sm:$0xff]
      %v245 = vld [vmem:[%s1 + $0x60] sm:$0xff]
      %v246 = vld [vmem:[%s1 + $0x68] sm:$0xff]
      %v247 = vld [vmem:[%s1 + $0x70] sm:$0xff]
      %v248 = vld [vmem:[%s1 + $0x78] sm:$0xff]
      %v249 = vld [vmem:[#allocation2 + $0x1] sm:$0xff]
      %v250 = vld [vmem:[#allocation2 + $0x9] sm:$0xff]
      %s251 = scalar_lea.vmem %s1, 128
      %v252 = vld [vmem:[%s251] sm:$0xff]
      %v253 = vld [vmem:[%s251 + $0x8] sm:$0xff]
      %v254 = vld [vmem:[%s251 + $0x10] sm:$0xff]
      %v255 = vld [vmem:[%s251 + $0x18] sm:$0xff]
      %v256 = vld [vmem:[%s251 + $0x20] sm:$0xff]
      %v257 = vld [vmem:[%s251 + $0x28] sm:$0xff]
      %v258 = vld [vmem:[%s251 + $0x30] sm:$0xff]
      %v259 = vld [vmem:[%s251 + $0x38] sm:$0xff]
      %v260 = vld [vmem:[%s251 + $0x40] sm:$0xff]
      %v261 = vld [vmem:[%s251 + $0x48] sm:$0xff]
      %v262 = vld [vmem:[%s251 + $0x50] sm:$0xff]
      %v263 = vld [vmem:[%s251 + $0x58] sm:$0xff]
      %v264 = vld [vmem:[%s251 + $0x60] sm:$0xff]
      %v265 = vld [vmem:[%s251 + $0x68] sm:$0xff]
      %v266 = vld [vmem:[%s251 + $0x70] sm:$0xff]
      %v267 = vld [vmem:[%s251 + $0x78] sm:$0xff]
      %268 = vmatprep.subr.mxu0 0.0
      %269 = vmatpush1.msra.mxu0 %v252
      %270 = vmatprep.subr.mxu0 0.0
      %271 = vmatpush1.msra.mxu0 %v253
      %272 = vmatprep.subr.mxu0 0.0
      %273 = vmatpush1.msra.mxu0 %v254
      %274 = vmatprep.subr.mxu0 0.0
      %275 = vmatpush1.msra.mxu0 %v255
      %276 = vmatprep.subr.mxu0 0.0
      %277 = vmatpush1.msra.mxu0 %v256
      %278 = vmatprep.subr.mxu0 0.0
      %279 = vmatpush1.msra.mxu0 %v257
      %280 = vmatprep.subr.mxu0 0.0
      %281 = vmatpush1.msra.mxu0 %v258
      %282 = vmatprep.subr.mxu0 0.0
      %283 = vmatpush1.msra.mxu0 %v259
      %284 = vmatprep.subr.mxu0 0.0
      %285 = vmatpush1.msra.mxu0 %v260
      %286 = vmatprep.subr.mxu0 0.0
      %287 = vmatpush1.msra.mxu0 %v261
      %288 = vmatprep.subr.mxu0 0.0
      %289 = vmatpush1.msra.mxu0 %v262
      %290 = vmatprep.subr.mxu0 0.0
      %291 = vmatpush1.msra.mxu0 %v263
      %292 = vmatprep.subr.mxu0 0.0
      %293 = vmatpush1.msra.mxu0 %v264
      %294 = vmatprep.subr.mxu0 0.0
      %295 = vmatpush1.msra.mxu0 %v265
      %296 = vmatprep.subr.mxu0 0.0
      %297 = vmatpush1.msra.mxu0 %v266
      %298 = vmatprep.subr.mxu0 0.0
      %299 = vmatpush1.msra.mxu0 %v267
      %300 = vmatprep.subr.mxu0 0.0
      %301 = vmatpush1.msra.mxu0 0.0
      %302 = vmatprep.subr.mxu0 0.0
      %303 = vmatpush1.msra.mxu0 0.0
      %304 = vmatprep.subr.mxu0 0.0
      %305 = vmatpush1.msra.mxu0 0.0
      %306 = vmatprep.subr.mxu0 0.0
      %307 = vmatpush1.msra.mxu0 0.0
      %308 = vmatprep.subr.mxu0 0.0
      %309 = vmatpush1.msra.mxu0 0.0
      %310 = vmatprep.subr.mxu0 0.0
      %311 = vmatpush1.msra.mxu0 0.0
      %312 = vmatprep.subr.mxu0 0.0
      %313 = vmatpush1.msra.mxu0 0.0
      %314 = vmatprep.subr.mxu0 0.0
      %315 = vmatpush1.msra.mxu0 0.0
      %316 = vmatprep.subr.mxu0 0.0
      %317 = vmatpush1.msra.mxu0 0.0
      %318 = vmatprep.subr.mxu0 0.0
      %319 = vmatpush1.msra.mxu0 0.0
      %320 = vmatprep.subr.mxu0 0.0
      %321 = vmatpush1.msra.mxu0 0.0
      %322 = vmatprep.subr.mxu0 0.0
      %323 = vmatpush1.msra.mxu0 0.0
      %324 = vmatprep.subr.mxu0 0.0
      %325 = vmatpush1.msra.mxu0 0.0
      %326 = vmatprep.subr.mxu0 0.0
      %327 = vmatpush1.msra.mxu0 0.0
      %328 = vmatprep.subr.mxu0 0.0
      %329 = vmatpush1.msra.mxu0 0.0
      %330 = vmatprep.subr.mxu0 0.0
      %331 = vmatpush1.msra.mxu0 0.0
      %332 = vmatprep.mubr.f32.mxu0 0.0
      %333 = vmatmul.mubr.f32.gmra.mrb[0].mxu0 %v249
      %v334 = vpop.f32.mrb[0].mxu0
      %v335 = vadd.f32 0.0, %v334
      %v336 = vpop.f32.mrb[0].mxu0
      %337 = vmatprep.mubr.f32.mxu0 0.0
      %338 = vmatmul.mubr.f32.gmra.mrb[0].mxu0 %v250
      %v339 = vpop.f32.mrb[0].mxu0
      %v340 = vadd.f32 0.0, %v339
      %v341 = vpop.f32.mrb[0].mxu0
      %342 = vdwg.mxu0
      %343 = vmatprep.subr.mxu0 0.0
      %344 = vmatpush1.msra.mxu0 %v233
      %345 = vmatprep.subr.mxu0 0.0
      %346 = vmatpush1.msra.mxu0 %v234
      %347 = vmatprep.subr.mxu0 0.0
      %348 = vmatpush1.msra.mxu0 %v235
      %349 = vmatprep.subr.mxu0 0.0
      %350 = vmatpush1.msra.mxu0 %v236
      %351 = vmatprep.subr.mxu0 0.0
      %352 = vmatpush1.msra.mxu0 %v237
      %353 = vmatprep.subr.mxu0 0.0
      %354 = vmatpush1.msra.mxu0 %v238
      %355 = vmatprep.subr.mxu0 0.0
      %356 = vmatpush1.msra.mxu0 %v239
      %357 = vmatprep.subr.mxu0 0.0
      %358 = vmatpush1.msra.mxu0 %v240
      %359 = vmatprep.subr.mxu0 0.0
      %360 = vmatpush1.msra.mxu0 %v241
      %361 = vmatprep.subr.mxu0 0.0
      %362 = vmatpush1.msra.mxu0 %v242
      %363 = vmatprep.subr.mxu0 0.0
      %364 = vmatpush1.msra.mxu0 %v243
      %365 = vmatprep.subr.mxu0 0.0
      %366 = vmatpush1.msra.mxu0 %v244
      %367 = vmatprep.subr.mxu0 0.0
      %368 = vmatpush1.msra.mxu0 %v245
      %369 = vmatprep.subr.mxu0 0.0
      %370 = vmatpush1.msra.mxu0 %v246
      %371 = vmatprep.subr.mxu0 0.0
      %372 = vmatpush1.msra.mxu0 %v247
      %373 = vmatprep.subr.mxu0 0.0
      %374 = vmatpush1.msra.mxu0 %v248
      %375 = vmatprep.subr.mxu0 0.0
      %376 = vmatpush1.msra.mxu0 0.0
      %377 = vmatprep.subr.mxu0 0.0
      %378 = vmatpush1.msra.mxu0 0.0
      %379 = vmatprep.subr.mxu0 0.0
      %380 = vmatpush1.msra.mxu0 0.0
      %381 = vmatprep.subr.mxu0 0.0
      %382 = vmatpush1.msra.mxu0 0.0
      %383 = vmatprep.subr.mxu0 0.0
      %384 = vmatpush1.msra.mxu0 0.0
      %385 = vmatprep.subr.mxu0 0.0
      %386 = vmatpush1.msra.mxu0 0.0
      %387 = vmatprep.subr.mxu0 0.0
      %388 = vmatpush1.msra.mxu0 0.0
      %389 = vmatprep.subr.mxu0 0.0
      %390 = vmatpush1.msra.mxu0 0.0
      %391 = vmatprep.subr.mxu0 0.0
      %392 = vmatpush1.msra.mxu0 0.0
      %393 = vmatprep.subr.mxu0 0.0
      %394 = vmatpush1.msra.mxu0 0.0
      %395 = vmatprep.subr.mxu0 0.0
      %396 = vmatpush1.msra.mxu0 0.0
      %397 = vmatprep.subr.mxu0 0.0
      %398 = vmatpush1.msra.mxu0 0.0
      %399 = vmatprep.subr.mxu0 0.0
      %400 = vmatpush1.msra.mxu0 0.0
      %401 = vmatprep.subr.mxu0 0.0
      %402 = vmatpush1.msra.mxu0 0.0
      %403 = vmatprep.subr.mxu0 0.0
      %404 = vmatpush1.msra.mxu0 0.0
      %405 = vmatprep.subr.mxu0 0.0
      %406 = vmatpush1.msra.mxu0 0.0
      %407 = vmatprep.mubr.f32.mxu0 0.0
      %408 = vmatmul.mubr.f32.gmra.mrb[0].mxu0 %v231
      %v409 = vpop.f32.mrb[0].mxu0
      %v410 = vadd.f32 %v335, %v409
      %v411 = vpop.f32.mrb[0].mxu0
      %412 = vmatprep.mubr.f32.mxu0 0.0
      %413 = vmatmul.mubr.f32.gmra.mrb[0].mxu0 %v232
      %v414 = vpop.f32.mrb[0].mxu0
      %v415 = vadd.f32 %v340, %v414
      %v416 = vpop.f32.mrb[0].mxu0
      %417 = vdwg.mxu0
      %v418 = vld [vmem:[#allocation2 + $0x2] sm:$0xff]
      %v419 = vld [vmem:[#allocation2 + $0xa] sm:$0xff]
      %s420 = scalar_lea.vmem %s1, 256
      %v421 = vld [vmem:[%s420] sm:$0xff]
      %v422 = vld [vmem:[%s420 + $0x8] sm:$0xff]
      %v423 = vld [vmem:[%s420 + $0x10] sm:$0xff]
      %v424 = vld [vmem:[%s420 + $0x18] sm:$0xff]
      %v425 = vld [vmem:[%s420 + $0x20] sm:$0xff]
      %v426 = vld [vmem:[%s420 + $0x28] sm:$0xff]
      %v427 = vld [vmem:[%s420 + $0x30] sm:$0xff]
      %v428 = vld [vmem:[%s420 + $0x38] sm:$0xff]
      %v429 = vld [vmem:[%s420 + $0x40] sm:$0xff]
      %v430 = vld [vmem:[%s420 + $0x48] sm:$0xff]
      %v431 = vld [vmem:[%s420 + $0x50] sm:$0xff]
      %v432 = vld [vmem:[%s420 + $0x58] sm:$0xff]
      %v433 = vld [vmem:[%s420 + $0x60] sm:$0xff]
      %v434 = vld [vmem:[%s420 + $0x68] sm:$0xff]
      %v435 = vld [vmem:[%s420 + $0x70] sm:$0xff]
      %v436 = vld [vmem:[%s420 + $0x78] sm:$0xff]
      %437 = vmatprep.subr.mxu0 0.0
      %438 = vmatpush1.msra.mxu0 %v421
      %439 = vmatprep.subr.mxu0 0.0
      %440 = vmatpush1.msra.mxu0 %v422
      %441 = vmatprep.subr.mxu0 0.0
      %442 = vmatpush1.msra.mxu0 %v423
      %443 = vmatprep.subr.mxu0 0.0
      %444 = vmatpush1.msra.mxu0 %v424
      %445 = vmatprep.subr.mxu0 0.0
      %446 = vmatpush1.msra.mxu0 %v425
      %447 = vmatprep.subr.mxu0 0.0
      %448 = vmatpush1.msra.mxu0 %v426
      %449 = vmatprep.subr.mxu0 0.0
      %450 = vmatpush1.msra.mxu0 %v427
      %451 = vmatprep.subr.mxu0 0.0
      %452 = vmatpush1.msra.mxu0 %v428
      %453 = vmatprep.subr.mxu0 0.0
      %454 = vmatpush1.msra.mxu0 %v429
      %455 = vmatprep.subr.mxu0 0.0
      %456 = vmatpush1.msra.mxu0 %v430
      %457 = vmatprep.subr.mxu0 0.0
      %458 = vmatpush1.msra.mxu0 %v431
      %459 = vmatprep.subr.mxu0 0.0
      %460 = vmatpush1.msra.mxu0 %v432
      %461 = vmatprep.subr.mxu0 0.0
      %462 = vmatpush1.msra.mxu0 %v433
      %463 = vmatprep.subr.mxu0 0.0
      %464 = vmatpush1.msra.mxu0 %v434
      %465 = vmatprep.subr.mxu0 0.0
      %466 = vmatpush1.msra.mxu0 %v435
      %467 = vmatprep.subr.mxu0 0.0
      %468 = vmatpush1.msra.mxu0 %v436
      %469 = vmatprep.subr.mxu0 0.0
      %470 = vmatpush1.msra.mxu0 0.0
      %471 = vmatprep.subr.mxu0 0.0
      %472 = vmatpush1.msra.mxu0 0.0
      %473 = vmatprep.subr.mxu0 0.0
      %474 = vmatpush1.msra.mxu0 0.0
      %475 = vmatprep.subr.mxu0 0.0
      %476 = vmatpush1.msra.mxu0 0.0
      %477 = vmatprep.subr.mxu0 0.0
      %478 = vmatpush1.msra.mxu0 0.0
      %479 = vmatprep.subr.mxu0 0.0
      %480 = vmatpush1.msra.mxu0 0.0
      %481 = vmatprep.subr.mxu0 0.0
      %482 = vmatpush1.msra.mxu0 0.0
      %483 = vmatprep.subr.mxu0 0.0
      %484 = vmatpush1.msra.mxu0 0.0
      %485 = vmatprep.subr.mxu0 0.0
      %486 = vmatpush1.msra.mxu0 0.0
      %487 = vmatprep.subr.mxu0 0.0
      %488 = vmatpush1.msra.mxu0 0.0
      %489 = vmatprep.subr.mxu0 0.0
      %490 = vmatpush1.msra.mxu0 0.0
      %491 = vmatprep.subr.mxu0 0.0
      %492 = vmatpush1.msra.mxu0 0.0
      %493 = vmatprep.subr.mxu0 0.0
      %494 = vmatpush1.msra.mxu0 0.0
      %495 = vmatprep.subr.mxu0 0.0
      %496 = vmatpush1.msra.mxu0 0.0
      %497 = vmatprep.subr.mxu0 0.0
      %498 = vmatpush1.msra.mxu0 0.0
      %499 = vmatprep.subr.mxu0 0.0
      %500 = vmatpush1.msra.mxu0 0.0
      %501 = vmatprep.mubr.f32.mxu0 0.0
      %502 = vmatmul.mubr.f32.gmra.mrb[0].mxu0 %v418
      %v503 = vpop.f32.mrb[0].mxu0
      %v504 = vadd.f32 0.0, %v503
      %v505 = vpop.f32.mrb[0].mxu0
      %506 = vmatprep.mubr.f32.mxu0 0.0
      %507 = vmatmul.mubr.f32.gmra.mrb[0].mxu0 %v419
      %v508 = vpop.f32.mrb[0].mxu0
      %v509 = vadd.f32 0.0, %v508
      %v510 = vpop.f32.mrb[0].mxu0
      %511 = vdwg.mxu0
      %v512 = vadd.f32 %v410, %v504
      %v513 = vadd.f32 %v415, %v509
      %v514 = vld [vmem:[%s2] sm:$0x1]
      %v516 = vlaneseq
      %v517 = vshrl.u32 %v516, 7
      %v518 = vsub.s32 0, %v517
      %v519 = vrot.slane %v514, %v518
      %v521 = vadd.f32 %v512, %v519
      %v522 = vadd.f32 %v513, %v519
      %v523 = vmax.f32 %v521, 0.0
      %v524 = vmax.f32 %v522, 0.0
      %525 = vst [vmem:[#allocation2 + $0x1] sm:$0xff] %v523
      %526 = vst [vmem:[#allocation2 + $0x9] sm:$0xff] %v524
      %v527 = vld [vmem:[#allocation2] sm:$0xff]
      %v528 = vld [vmem:[#allocation2 + $0x8] sm:$0xff]
      %v529 = vld [vmem:[%s3] sm:$0xff]
      %v530 = vld [vmem:[%s3 + $0x8] sm:$0xff]
      %v531 = vld [vmem:[%s3 + $0x10] sm:$0xff]
      %v532 = vld [vmem:[%s3 + $0x18] sm:$0xff]
      %v533 = vld [vmem:[%s3 + $0x20] sm:$0xff]
      %v534 = vld [vmem:[%s3 + $0x28] sm:$0xff]
      %v535 = vld [vmem:[%s3 + $0x30] sm:$0xff]
      %v536 = vld [vmem:[%s3 + $0x38] sm:$0xff]
      %v537 = vld [vmem:[%s3 + $0x40] sm:$0xff]
      %v538 = vld [vmem:[%s3 + $0x48] sm:$0xff]
      %v539 = vld [vmem:[%s3 + $0x50] sm:$0xff]
      %v540 = vld [vmem:[%s3 + $0x58] sm:$0xff]
      %v541 = vld [vmem:[%s3 + $0x60] sm:$0xff]
      %v542 = vld [vmem:[%s3 + $0x68] sm:$0xff]
      %v543 = vld [vmem:[%s3 + $0x70] sm:$0xff]
      %v544 = vld [vmem:[%s3 + $0x78] sm:$0xff]
      %v545 = vld [vmem:[#allocation2 + $0x1] sm:$0xff]
      %v546 = vld [vmem:[#allocation2 + $0x9] sm:$0xff]
      %s547 = scalar_lea.vmem %s3, 128
      %v548 = vld [vmem:[%s547] sm:$0xff]
      %v549 = vld [vmem:[%s547 + $0x8] sm:$0xff]
      %v550 = vld [vmem:[%s547 + $0x10] sm:$0xff]
      %v551 = vld [vmem:[%s547 + $0x18] sm:$0xff]
      %v552 = vld [vmem:[%s547 + $0x20] sm:$0xff]
      %v553 = vld [vmem:[%s547 + $0x28] sm:$0xff]
      %v554 = vld [vmem:[%s547 + $0x30] sm:$0xff]
      %v555 = vld [vmem:[%s547 + $0x38] sm:$0xff]
      %v556 = vld [vmem:[%s547 + $0x40] sm:$0xff]
      %v557 = vld [vmem:[%s547 + $0x48] sm:$0xff]
      %v558 = vld [vmem:[%s547 + $0x50] sm:$0xff]
      %v559 = vld [vmem:[%s547 + $0x58] sm:$0xff]
      %v560 = vld [vmem:[%s547 + $0x60] sm:$0xff]
      %v561 = vld [vmem:[%s547 + $0x68] sm:$0xff]
      %v562 = vld [vmem:[%s547 + $0x70] sm:$0xff]
      %v563 = vld [vmem:[%s547 + $0x78] sm:$0xff]
      %564 = vmatprep.subr.mxu0 0.0
      %565 = vmatpush1.msra.mxu0 %v548
      %566 = vmatprep.subr.mxu0 0.0
      %567 = vmatpush1.msra.mxu0 %v549
      %568 = vmatprep.subr.mxu0 0.0
      %569 = vmatpush1.msra.mxu0 %v550
      %570 = vmatprep.subr.mxu0 0.0
      %571 = vmatpush1.msra.mxu0 %v551
      %572 = vmatprep.subr.mxu0 0.0
      %573 = vmatpush1.msra.mxu0 %v552
      %574 = vmatprep.subr.mxu0 0.0
      %575 = vmatpush1.msra.mxu0 %v553
      %576 = vmatprep.subr.mxu0 0.0
      %577 = vmatpush1.msra.mxu0 %v554
      %578 = vmatprep.subr.mxu0 0.0
      %579 = vmatpush1.msra.mxu0 %v555
      %580 = vmatprep.subr.mxu0 0.0
      %581 = vmatpush1.msra.mxu0 %v556
      %582 = vmatprep.subr.mxu0 0.0
      %583 = vmatpush1.msra.mxu0 %v557
      %584 = vmatprep.subr.mxu0 0.0
      %585 = vmatpush1.msra.mxu0 %v558
      %586 = vmatprep.subr.mxu0 0.0
      %587 = vmatpush1.msra.mxu0 %v559
      %588 = vmatprep.subr.mxu0 0.0
      %589 = vmatpush1.msra.mxu0 %v560
      %590 = vmatprep.subr.mxu0 0.0
      %591 = vmatpush1.msra.mxu0 %v561
      %592 = vmatprep.subr.mxu0 0.0
      %593 = vmatpush1.msra.mxu0 %v562
      %594 = vmatprep.subr.mxu0 0.0
      %595 = vmatpush1.msra.mxu0 %v563
      %596 = vmatprep.subr.mxu0 0.0
      %597 = vmatpush1.msra.mxu0 0.0
      %598 = vmatprep.subr.mxu0 0.0
      %599 = vmatpush1.msra.mxu0 0.0
      %600 = vmatprep.subr.mxu0 0.0
      %601 = vmatpush1.msra.mxu0 0.0
      %602 = vmatprep.subr.mxu0 0.0
      %603 = vmatpush1.msra.mxu0 0.0
      %604 = vmatprep.subr.mxu0 0.0
      %605 = vmatpush1.msra.mxu0 0.0
      %606 = vmatprep.subr.mxu0 0.0
      %607 = vmatpush1.msra.mxu0 0.0
      %608 = vmatprep.subr.mxu0 0.0
      %609 = vmatpush1.msra.mxu0 0.0
      %610 = vmatprep.subr.mxu0 0.0
      %611 = vmatpush1.msra.mxu0 0.0
      %612 = vmatprep.subr.mxu0 0.0
      %613 = vmatpush1.msra.mxu0 0.0
      %614 = vmatprep.subr.mxu0 0.0
      %615 = vmatpush1.msra.mxu0 0.0
      %616 = vmatprep.subr.mxu0 0.0
      %617 = vmatpush1.msra.mxu0 0.0
      %618 = vmatprep.subr.mxu0 0.0
      %619 = vmatpush1.msra.mxu0 0.0
      %620 = vmatprep.subr.mxu0 0.0
      %621 = vmatpush1.msra.mxu0 0.0
      %622 = vmatprep.subr.mxu0 0.0
      %623 = vmatpush1.msra.mxu0 0.0
      %624 = vmatprep.subr.mxu0 0.0
      %625 = vmatpush1.msra.mxu0 0.0
      %626 = vmatprep.subr.mxu0 0.0
      %627 = vmatpush1.msra.mxu0 0.0
      %628 = vmatprep.mubr.f32.mxu0 0.0
      %629 = vmatmul.mubr.f32.gmra.mrb[0].mxu0 %v545
      %v630 = vpop.f32.mrb[0].mxu0
      %v631 = vadd.f32 0.0, %v630
      %v632 = vpop.f32.mrb[0].mxu0
      %633 = vmatprep.mubr.f32.mxu0 0.0
      %634 = vmatmul.mubr.f32.gmra.mrb[0].mxu0 %v546
      %v635 = vpop.f32.mrb[0].mxu0
      %v636 = vadd.f32 0.0, %v635
      %v637 = vpop.f32.mrb[0].mxu0
      %638 = vdwg.mxu0
      %639 = vmatprep.subr.mxu0 0.0
      %640 = vmatpush1.msra.mxu0 %v529
      %641 = vmatprep.subr.mxu0 0.0
      %642 = vmatpush1.msra.mxu0 %v530
      %643 = vmatprep.subr.mxu0 0.0
      %644 = vmatpush1.msra.mxu0 %v531
      %645 = vmatprep.subr.mxu0 0.0
      %646 = vmatpush1.msra.mxu0 %v532
      %647 = vmatprep.subr.mxu0 0.0
      %648 = vmatpush1.msra.mxu0 %v533
      %649 = vmatprep.subr.mxu0 0.0
      %650 = vmatpush1.msra.mxu0 %v534
      %651 = vmatprep.subr.mxu0 0.0
      %652 = vmatpush1.msra.mxu0 %v535
      %653 = vmatprep.subr.mxu0 0.0
      %654 = vmatpush1.msra.mxu0 %v536
      %655 = vmatprep.subr.mxu0 0.0
      %656 = vmatpush1.msra.mxu0 %v537
      %657 = vmatprep.subr.mxu0 0.0
      %658 = vmatpush1.msra.mxu0 %v538
      %659 = vmatprep.subr.mxu0 0.0
      %660 = vmatpush1.msra.mxu0 %v539
      %661 = vmatprep.subr.mxu0 0.0
      %662 = vmatpush1.msra.mxu0 %v540
      %663 = vmatprep.subr.mxu0 0.0
      %664 = vmatpush1.msra.mxu0 %v541
      %665 = vmatprep.subr.mxu0 0.0
      %666 = vmatpush1.msra.mxu0 %v542
      %667 = vmatprep.subr.mxu0 0.0
      %668 = vmatpush1.msra.mxu0 %v543
      %669 = vmatprep.subr.mxu0 0.0
      %670 = vmatpush1.msra.mxu0 %v544
      %671 = vmatprep.subr.mxu0 0.0
      %672 = vmatpush1.msra.mxu0 0.0
      %673 = vmatprep.subr.mxu0 0.0
      %674 = vmatpush1.msra.mxu0 0.0
      %675 = vmatprep.subr.mxu0 0.0
      %676 = vmatpush1.msra.mxu0 0.0
      %677 = vmatprep.subr.mxu0 0.0
      %678 = vmatpush1.msra.mxu0 0.0
      %679 = vmatprep.subr.mxu0 0.0
      %680 = vmatpush1.msra.mxu0 0.0
      %681 = vmatprep.subr.mxu0 0.0
      %682 = vmatpush1.msra.mxu0 0.0
      %683 = vmatprep.subr.mxu0 0.0
      %684 = vmatpush1.msra.mxu0 0.0
      %685 = vmatprep.subr.mxu0 0.0
      %686 = vmatpush1.msra.mxu0 0.0
      %687 = vmatprep.subr.mxu0 0.0
      %688 = vmatpush1.msra.mxu0 0.0
      %689 = vmatprep.subr.mxu0 0.0
      %690 = vmatpush1.msra.mxu0 0.0
      %691 = vmatprep.subr.mxu0 0.0
      %692 = vmatpush1.msra.mxu0 0.0
      %693 = vmatprep.subr.mxu0 0.0
      %694 = vmatpush1.msra.mxu0 0.0
      %695 = vmatprep.subr.mxu0 0.0
      %696 = vmatpush1.msra.mxu0 0.0
      %697 = vmatprep.subr.mxu0 0.0
      %698 = vmatpush1.msra.mxu0 0.0
      %699 = vmatprep.subr.mxu0 0.0
      %700 = vmatpush1.msra.mxu0 0.0
      %701 = vmatprep.subr.mxu0 0.0
      %702 = vmatpush1.msra.mxu0 0.0
      %703 = vmatprep.mubr.f32.mxu0 0.0
      %704 = vmatmul.mubr.f32.gmra.mrb[0].mxu0 %v527
      %v705 = vpop.f32.mrb[0].mxu0
      %v706 = vadd.f32 %v631, %v705
      %v707 = vpop.f32.mrb[0].mxu0
      %708 = vmatprep.mubr.f32.mxu0 0.0
      %709 = vmatmul.mubr.f32.gmra.mrb[0].mxu0 %v528
      %v710 = vpop.f32.mrb[0].mxu0
      %v711 = vadd.f32 %v636, %v710
      %v712 = vpop.f32.mrb[0].mxu0
      %713 = vdwg.mxu0
      %v714 = vld [vmem:[#allocation2 + $0x2] sm:$0xff]
      %v715 = vld [vmem:[#allocation2 + $0xa] sm:$0xff]
      %s716 = scalar_lea.vmem %s3, 256
      %v717 = vld [vmem:[%s716] sm:$0xff]
      %v718 = vld [vmem:[%s716 + $0x8] sm:$0xff]
      %v719 = vld [vmem:[%s716 + $0x10] sm:$0xff]
      %v720 = vld [vmem:[%s716 + $0x18] sm:$0xff]
      %v721 = vld [vmem:[%s716 + $0x20] sm:$0xff]
      %v722 = vld [vmem:[%s716 + $0x28] sm:$0xff]
      %v723 = vld [vmem:[%s716 + $0x30] sm:$0xff]
      %v724 = vld [vmem:[%s716 + $0x38] sm:$0xff]
      %v725 = vld [vmem:[%s716 + $0x40] sm:$0xff]
      %v726 = vld [vmem:[%s716 + $0x48] sm:$0xff]
      %v727 = vld [vmem:[%s716 + $0x50] sm:$0xff]
      %v728 = vld [vmem:[%s716 + $0x58] sm:$0xff]
      %v729 = vld [vmem:[%s716 + $0x60] sm:$0xff]
      %v730 = vld [vmem:[%s716 + $0x68] sm:$0xff]
      %v731 = vld [vmem:[%s716 + $0x70] sm:$0xff]
      %v732 = vld [vmem:[%s716 + $0x78] sm:$0xff]
      %733 = vmatprep.subr.mxu0 0.0
      %734 = vmatpush1.msra.mxu0 %v717
      %735 = vmatprep.subr.mxu0 0.0
      %736 = vmatpush1.msra.mxu0 %v718
      %737 = vmatprep.subr.mxu0 0.0
      %738 = vmatpush1.msra.mxu0 %v719
      %739 = vmatprep.subr.mxu0 0.0
      %740 = vmatpush1.msra.mxu0 %v720
      %741 = vmatprep.subr.mxu0 0.0
      %742 = vmatpush1.msra.mxu0 %v721
      %743 = vmatprep.subr.mxu0 0.0
      %744 = vmatpush1.msra.mxu0 %v722
      %745 = vmatprep.subr.mxu0 0.0
      %746 = vmatpush1.msra.mxu0 %v723
      %747 = vmatprep.subr.mxu0 0.0
      %748 = vmatpush1.msra.mxu0 %v724
      %749 = vmatprep.subr.mxu0 0.0
      %750 = vmatpush1.msra.mxu0 %v725
      %751 = vmatprep.subr.mxu0 0.0
      %752 = vmatpush1.msra.mxu0 %v726
      %753 = vmatprep.subr.mxu0 0.0
      %754 = vmatpush1.msra.mxu0 %v727
      %755 = vmatprep.subr.mxu0 0.0
      %756 = vmatpush1.msra.mxu0 %v728
      %757 = vmatprep.subr.mxu0 0.0
      %758 = vmatpush1.msra.mxu0 %v729
      %759 = vmatprep.subr.mxu0 0.0
      %760 = vmatpush1.msra.mxu0 %v730
      %761 = vmatprep.subr.mxu0 0.0
      %762 = vmatpush1.msra.mxu0 %v731
      %763 = vmatprep.subr.mxu0 0.0
      %764 = vmatpush1.msra.mxu0 %v732
      %765 = vmatprep.subr.mxu0 0.0
      %766 = vmatpush1.msra.mxu0 0.0
      %767 = vmatprep.subr.mxu0 0.0
      %768 = vmatpush1.msra.mxu0 0.0
      %769 = vmatprep.subr.mxu0 0.0
      %770 = vmatpush1.msra.mxu0 0.0
      %771 = vmatprep.subr.mxu0 0.0
      %772 = vmatpush1.msra.mxu0 0.0
      %773 = vmatprep.subr.mxu0 0.0
      %774 = vmatpush1.msra.mxu0 0.0
      %775 = vmatprep.subr.mxu0 0.0
      %776 = vmatpush1.msra.mxu0 0.0
      %777 = vmatprep.subr.mxu0 0.0
      %778 = vmatpush1.msra.mxu0 0.0
      %779 = vmatprep.subr.mxu0 0.0
      %780 = vmatpush1.msra.mxu0 0.0
      %781 = vmatprep.subr.mxu0 0.0
      %782 = vmatpush1.msra.mxu0 0.0
      %783 = vmatprep.subr.mxu0 0.0
      %784 = vmatpush1.msra.mxu0 0.0
      %785 = vmatprep.subr.mxu0 0.0
      %786 = vmatpush1.msra.mxu0 0.0
      %787 = vmatprep.subr.mxu0 0.0
      %788 = vmatpush1.msra.mxu0 0.0
      %789 = vmatprep.subr.mxu0 0.0
      %790 = vmatpush1.msra.mxu0 0.0
      %791 = vmatprep.subr.mxu0 0.0
      %792 = vmatpush1.msra.mxu0 0.0
      %793 = vmatprep.subr.mxu0 0.0
      %794 = vmatpush1.msra.mxu0 0.0
      %795 = vmatprep.subr.mxu0 0.0
      %796 = vmatpush1.msra.mxu0 0.0
      %797 = vmatprep.mubr.f32.mxu0 0.0
      %798 = vmatmul.mubr.f32.gmra.mrb[0].mxu0 %v714
      %v799 = vpop.f32.mrb[0].mxu0
      %v800 = vadd.f32 0.0, %v799
      %v801 = vpop.f32.mrb[0].mxu0
      %802 = vmatprep.mubr.f32.mxu0 0.0
      %803 = vmatmul.mubr.f32.gmra.mrb[0].mxu0 %v715
      %v804 = vpop.f32.mrb[0].mxu0
      %v805 = vadd.f32 0.0, %v804
      %v806 = vpop.f32.mrb[0].mxu0
      %807 = vdwg.mxu0
      %v808 = vadd.f32 %v706, %v800
      %v809 = vadd.f32 %v711, %v805
      %v810 = vld [vmem:[%s4] sm:$0x1]
      %v812 = vlaneseq
      %v813 = vshrl.u32 %v812, 7
      %v814 = vsub.s32 0, %v813
      %v815 = vrot.slane %v810, %v814
      %v817 = vadd.f32 %v808, %v815
      %v818 = vadd.f32 %v809, %v815
      %v819 = vadd.f32 %v817, %v227
      %v820 = vadd.f32 %v818, %v228
      %v821 = vmax.f32 %v819, 0.0
      %v822 = vmax.f32 %v820, 0.0
      %823 = vst [vmem:[%s224] sm:$0xff] %v821
      %824 = vst [vmem:[%s224 + $0x8] sm:$0xff] %v822
      %p825 = scmp.lt.s32.totalorder %s16, 1
      %s826 = scalar_select %p825, %s16, 1
      %s827 = smul.addr %s826, 2
      %s828 = smul.addr %s827, 8
      %s829 = scalar_lea.vmem %s5, %s828
      // Predicated region
      $region41: #{basic_block_pallas.1} parent=39 // pred_check
        %p830 = pneg %p144
      $region42: #{basic_block_pallas.1} parent=39 // pred_check_branch
        %832 = sbr.rel (%p830) target = $region44
      $region43: #{basic_block_pallas.1} parent=39 // pred_region
        _
      $region44: #{basic_block_pallas.1} parent=39 // pred_fallthru
        _
    $region40: #{basic_block_pallas.1} parent=5 // pred_fallthru
      _
    %p833 = scmp.le.s32.totalorder 2, %s11
    // Predicated region
    $region45: #{basic_block_pallas.1} parent=5 // pred_check
      %p834 = pneg %p833
    $region46: #{basic_block_pallas.1} parent=5 // pred_check_branch
      %836 = sbr.rel (%p834) target = $region48
    $region47: #{basic_block_pallas.1} parent=5 // pred_region
      %s837 = ssub.s32 %s11, 2
      // Predicated region
      $region49: #{basic_block_pallas.1} parent=47 // pred_check
        %p838 = pneg %p150
      $region50: #{basic_block_pallas.1} parent=47 // pred_check_branch
        %840 = sbr.rel (%p838) target = $region52
      $region51: #{basic_block_pallas.1} parent=47 // pred_region
        %p841 = scmp.lt.s32.totalorder %s17, 1
        %s842 = scalar_select %p841, %s17, 1
        %s843 = smul.addr %s842, 2
        %s844 = smul.addr %s843, 8
        %s845 = scalar_lea.vmem %s5, %s844
      $region52: #{basic_block_pallas.1} parent=47 // pred_fallthru
        _
    $region48: #{basic_block_pallas.1} parent=5 // pred_fallthru
      _
  $region6: #{basic_block_pallas.1} parent=0 // loop_footer
    %s15 = sadd.s32 1, %s11
  $region7: #{basic_block_pallas.1} parent=0 // loop_footer_branch
    %10 = sbr.rel target = $region3
  $region8: #{basic_block_pallas.1} parent=0 // loop_exit
    _

</llo_original>
